<compile_context>
chip_gen: v7x
topology: tpu7x:2x2x1
jax: 0.10.0
libtpu: 0.0.40
codegen_flags: <defaults>
</compile_context>

<pallas_src>
import functools

import jax
import jax.numpy as jnp
from jax import lax
from jax.experimental import pallas as pl
from jax.experimental.pallas import tpu as pltpu

STATE_DIM = 4
ACTION_DIM = 2
HIDDEN_DIM = 128

TILE_B = 2048      # batch rows per grid step (amortize per-step overhead)
SUB_B = 256        # rows per inner sub-chunk (bounds vreg pressure / spills)


def _is_pre_v6_chip():
    """bf16 packed VALU elementwise only pays off on v6e/v7x; use f32 on older chips."""
    try:
        kind = jax.devices()[0].device_kind.lower()
    except Exception:
        return False
    return any(t in kind for t in ("v2", "v3", "v4", "v5"))


_BF16_ELEMENTWISE = not _is_pre_v6_chip()


def qvalue_kernel(x_ref, a_ref, w1x_ref, w1a_ref, b1_ref, w2_ref, b2_ref,
                  w3_ref, b3_ref, out_ref, *, sub, bf16_ew):
    bf16 = jnp.bfloat16
    nsub = x_ref.shape[0] // sub                 # static trip count

    # Hoist weight/bias loads (and one-time casts) out of the inner loop.
    w1x = w1x_ref[...]
    w1a = w1a_ref[...]
    w2 = w2_ref[...]
    b3 = b3_ref[0]
    if bf16_ew:
        b1 = b1_ref[...].astype(bf16)
        b2 = b2_ref[...].astype(bf16)
        w3 = w3_ref[...].astype(bf16)
    else:
        b1 = b1_ref[...]
        b2 = b2_ref[...]
        w3 = w3_ref[...]

    def body(j, carry):
        r = j * sub
        if not isinstance(r, int):
            r = pl.multiple_of(r, sub)
        xs = x_ref[pl.ds(r, sub), :].astype(bf16)
        av = a_ref[pl.ds(r, sub), :].astype(bf16)
        # fc1: fused concat -> x@w1x + a@w1a (+ b1)   (bf16 MXU, f32 accum)
        h1f = (jnp.dot(xs, w1x, preferred_element_type=jnp.float32)
               + jnp.dot(av, w1a, preferred_element_type=jnp.float32))
        if bf16_ew:
            h1 = jnp.maximum(h1f.astype(bf16) + b1, 0)          # packed bf16 VPU
        else:
            h1 = jnp.maximum(h1f + b1, 0.0).astype(bf16)        # f32 VPU (v5e-safe)
        # fc2
        h2f = jnp.dot(h1, w2, preferred_element_type=jnp.float32)
        if bf16_ew:
            h2 = jnp.maximum(h2f.astype(bf16) + b2, 0)
            # fc3 (H -> 1): bf16 product on VPU, f32-accumulated lane reduce (XLU).
            q = jnp.sum(h2 * w3, axis=-1, dtype=jnp.float32) + b3
        else:
            h2 = jnp.maximum(h2f + b2, 0.0)
            q = jnp.sum(h2 * w3, axis=-1) + b3
        # Lane-dense store into the (1, tb) output row.
        out_ref[0, pl.ds(r, sub)] = q.astype(out_ref.dtype)
        return carry

    if nsub == 1:
        body(0, 0)
    else:
        lax.fori_loop(0, nsub, body, 0, unroll=2)


def _round_up(n, m):
    return ((n + m - 1) // m) * m


def _resident(shape):
    nd = len(shape)
    return pl.BlockSpec(shape, lambda i: (0,) * nd)   # same block every grid step


def prepare_params(params):
    """One-time (per param-update) weight prep, hoisted off the per-call path:
    split w1 for the fused concat, pre-cast MXU operands to bf16, reshape fc3."""
    w1, b1, w2, b2, w3, b3 = params
    S = STATE_DIM
    w1x = w1[:S].astype(jnp.bfloat16)                        # (S, H)
    w1a = w1[S:].astype(jnp.bfloat16)                        # (A, H)
    b1f = jnp.reshape(b1, (1, -1)).astype(jnp.float32)       # (1, H)
    w2b = w2.astype(jnp.bfloat16)                            # (H, H)
    b2f = jnp.reshape(b2, (1, -1)).astype(jnp.float32)       # (1, H)
    w3r = jnp.reshape(w3, (1, -1)).astype(jnp.float32)       # (1, H)
    b3s = jnp.reshape(b3, (1,)).astype(jnp.float32)          # SMEM scalar
    return (w1x, w1a, b1f, w2b, b2f, w3r, b3s)


@functools.partial(jax.jit, static_argnames=("tile_b",))
def qvalue_forward(x, a, prepared, *, tile_b=TILE_B):
    """x: (B, state_dim), a: (B, action_dim), prepared = prepare_params(params)
    -> (B, 1) float32."""
    w1x, w1a, b1, w2b, b2, w3r, b3s = prepared
    B, S = x.shape
    A = a.shape[1]

    # Batch tiling.  No wrapper-side padding: cdiv grid; partial last block's
    # garbage rows are row-independent and never land in the (1, B) output.
    if B <= SUB_B:
        tb, sub = B, B                                  # single block / sub-chunk
    else:
        tile = max(SUB_B, _round_up(tile_b, SUB_B))
        half = _round_up(-(-B // 2), SUB_B)             # keep >=2 grid steps (v7x)
        tb = min(tile, half)
        sub = SUB_B
    grid = (pl.cdiv(B, tb),)

    kernel = functools.partial(qvalue_kernel, sub=sub, bf16_ew=_BF16_ELEMENTWISE)

    out = pl.pallas_call(
        kernel,
        out_shape=jax.ShapeDtypeStruct((1, B), jnp.float32),
        grid=grid,
        in_specs=[
            pl.BlockSpec((tb, S), lambda i: (i, 0)),             # x batch tile
            pl.BlockSpec((tb, A), lambda i: (i, 0)),             # a batch tile
            _resident(w1x.shape), _resident(w1a.shape), _resident(b1.shape),
            _resident(w2b.shape), _resident(b2.shape), _resident(w3r.shape),
            pl.BlockSpec(memory_space=pltpu.MemorySpace.SMEM),   # fc3 bias scalar
        ],
        out_specs=pl.BlockSpec((1, tb), lambda i: (0, i)),       # lane-dense out
        compiler_params=pltpu.CompilerParams(
            dimension_semantics=("parallel",),                   # megacore on v7x
            vmem_limit_bytes=48 * 1024 * 1024,                   # v5e 16MiB default
        ),
    )(x, a, w1x, w1a, b1, w2b, b2, w3r, b3s)

    return out.reshape(B, 1)


def init_params(key, state_dim=STATE_DIM, hidden_dim=HIDDEN_DIM, action_dim=ACTION_DIM):
    """torch.nn.Linear-style init: U(-1/sqrt(fan_in), +1/sqrt(fan_in)).
    Weights stored as (in_features, out_features) so the kernel computes x @ W + b."""
    def linear(k, fan_in, fan_out):
        kw, kb = jax.random.split(k)
        bound = 1.0 / jnp.sqrt(fan_in)
        w = jax.random.uniform(kw, (fan_in, fan_out), jnp.float32, -bound, bound)
        b = jax.random.uniform(kb, (1, fan_out), jnp.float32, -bound, bound)
        return w, b

    k1, k2, k3 = jax.random.split(key, 3)
    w1, b1 = linear(k1, state_dim + action_dim, hidden_dim)
    w2, b2 = linear(k2, hidden_dim, hidden_dim)
    w3, b3 = linear(k3, hidden_dim, 1)
    return (w1, b1, w2, b2, w3, b3)


def qvalue_ref(x, a, params):
    """Pure-JAX f32 reference for correctness checking."""
    w1, b1, w2, b2, w3, b3 = params
    xa = jnp.concatenate([x, a], axis=1)
    h = jnp.maximum(xa @ w1 + b1, 0.0)
    h = jnp.maximum(h @ w2 + b2, 0.0)
    return h @ w3 + b3


if __name__ == "__main__":
    key = jax.random.PRNGKey(0)
    kp, kx, ka = jax.random.split(key, 3)

    params = init_params(kp)
    prepared = prepare_params(params)          # hoisted weight prep (once)

    batch = 8
    x = jax.random.normal(kx, (batch, STATE_DIM), jnp.float32)
    a = jax.random.normal(ka, (batch, ACTION_DIM), jnp.float32)

    out = qvalue_forward(x, a, prepared)
    out = jax.block_until_ready(out)

    ref = qvalue_ref(x, a, params)
    assert out.shape == (batch, 1)
    # bf16 MXU operands (+ bf16 elementwise on v6e/v7x) vs pure-f32 reference.
    assert jnp.allclose(out, ref, atol=3e-2, rtol=3e-2), (
        f"max abs err {jnp.max(jnp.abs(out - ref))}")
    print("KERNEL_OK")
</pallas_src>

<mosaic_0001>
module attributes {stable_mosaic.version = 11 : i64} {
  func.func @qvalue_kernel(%arg0: i32, %arg1: memref<8x4xf32, #tpu.memory_space<vmem>>, %arg2: memref<8x2xf32, #tpu.memory_space<vmem>>, %arg3: memref<4x128xbf16, #tpu.memory_space<vmem>>, %arg4: memref<2x128xbf16, #tpu.memory_space<vmem>>, %arg5: memref<1x128xf32, #tpu.memory_space<vmem>>, %arg6: memref<128x128xbf16, #tpu.memory_space<vmem>>, %arg7: memref<1x128xf32, #tpu.memory_space<vmem>>, %arg8: memref<1x128xf32, #tpu.memory_space<vmem>>, %arg9: memref<1xf32, #tpu.memory_space<smem>>, %arg10: memref<1x8xf32, #tpu.memory_space<vmem>>) attributes {dimension_semantics = [#tpu.dimension_semantics<parallel>], iteration_bounds = array<i64: 1>, scalar_prefetch = 0 : i64, scratch_operands = 0 : i64, tpu.core_type = #tpu.core_type<tc>, window_params = [{transform_indices = @transform_0, window_bounds = array<i64: 8, 4>}, {transform_indices = @transform_1, window_bounds = array<i64: 8, 2>}, {pipeline_mode = #tpu.pipeline_mode<synchronous>, transform_indices = @transform_2, window_bounds = array<i64: 4, 128>}, {pipeline_mode = #tpu.pipeline_mode<synchronous>, transform_indices = @transform_3, window_bounds = array<i64: 2, 128>}, {pipeline_mode = #tpu.pipeline_mode<synchronous>, transform_indices = @transform_4, window_bounds = array<i64: 1, 128>}, {pipeline_mode = #tpu.pipeline_mode<synchronous>, transform_indices = @transform_5, window_bounds = array<i64: 128, 128>}, {pipeline_mode = #tpu.pipeline_mode<synchronous>, transform_indices = @transform_6, window_bounds = array<i64: 1, 128>}, {pipeline_mode = #tpu.pipeline_mode<synchronous>, transform_indices = @transform_7, window_bounds = array<i64: 1, 128>}, {transform_indices = @transform_8, window_bounds = array<i64: 1>}, {transform_indices = @transform_9, window_bounds = array<i64: 1, 8>}]} {
    %c0 = arith.constant 0 : index
    %c0_0 = arith.constant 0 : index
    %0 = vector.load %arg3[%c0, %c0_0] : memref<4x128xbf16, #tpu.memory_space<vmem>>, vector<4x128xbf16>
    %c0_1 = arith.constant 0 : index
    %c0_2 = arith.constant 0 : index
    %1 = vector.load %arg4[%c0_1, %c0_2] : memref<2x128xbf16, #tpu.memory_space<vmem>>, vector<2x128xbf16>
    %c0_3 = arith.constant 0 : index
    %c0_4 = arith.constant 0 : index
    %2 = vector.load %arg6[%c0_3, %c0_4] : memref<128x128xbf16, #tpu.memory_space<vmem>>, vector<128x128xbf16>
    %c0_5 = arith.constant 0 : index
    %3 = memref.load %arg9[%c0_5] : memref<1xf32, #tpu.memory_space<smem>>
    %c0_6 = arith.constant 0 : index
    %c0_7 = arith.constant 0 : index
    %4 = vector.load %arg5[%c0_6, %c0_7] : memref<1x128xf32, #tpu.memory_space<vmem>>, vector<1x128xf32>
    %5 = arith.truncf %4 : vector<1x128xf32> to vector<1x128xbf16>
    %c0_8 = arith.constant 0 : index
    %c0_9 = arith.constant 0 : index
    %6 = vector.load %arg7[%c0_8, %c0_9] : memref<1x128xf32, #tpu.memory_space<vmem>>, vector<1x128xf32>
    %7 = arith.truncf %6 : vector<1x128xf32> to vector<1x128xbf16>
    %c0_10 = arith.constant 0 : index
    %c0_11 = arith.constant 0 : index
    %8 = vector.load %arg8[%c0_10, %c0_11] : memref<1x128xf32, #tpu.memory_space<vmem>>, vector<1x128xf32>
    %9 = arith.truncf %8 : vector<1x128xf32> to vector<1x128xbf16>
    %c0_12 = arith.constant 0 : index
    %c0_13 = arith.constant 0 : index
    %10 = vector.load %arg1[%c0_12, %c0_13] : memref<8x4xf32, #tpu.memory_space<vmem>>, vector<8x4xf32>
    %11 = arith.truncf %10 : vector<8x4xf32> to vector<8x4xbf16>
    %c0_14 = arith.constant 0 : index
    %c0_15 = arith.constant 0 : index
    %12 = vector.load %arg2[%c0_14, %c0_15] : memref<8x2xf32, #tpu.memory_space<vmem>>, vector<8x2xf32>
    %13 = arith.truncf %12 : vector<8x2xf32> to vector<8x2xbf16>
    %cst = arith.constant dense<0.000000e+00> : vector<8x128xf32>
    %14 = tpu.matmul %11, %0, %cst {dimension_numbers = #tpu.dot_dimension_numbers<[1], [0], [0], [1], [0, 0, 1, 1], [], []>} : vector<8x4xbf16>, vector<4x128xbf16>, vector<8x128xf32> -> vector<8x128xf32>
    %cst_16 = arith.constant dense<0.000000e+00> : vector<8x128xf32>
    %15 = tpu.matmul %13, %1, %cst_16 {dimension_numbers = #tpu.dot_dimension_numbers<[1], [0], [0], [1], [0, 0, 1, 1], [], []>} : vector<8x2xbf16>, vector<2x128xbf16>, vector<8x128xf32> -> vector<8x128xf32>
    %16 = arith.addf %14, %15 : vector<8x128xf32>
    %17 = arith.truncf %16 : vector<8x128xf32> to vector<8x128xbf16>
    %18 = vector.broadcast %5 : vector<1x128xbf16> to vector<8x128xbf16>
    %19 = arith.addf %17, %18 : vector<8x128xbf16>
    %cst_17 = arith.constant 0.000000e+00 : bf16
    %20 = vector.broadcast %cst_17 : bf16 to vector<8x128xbf16>
    %21 = arith.maximumf %19, %20 : vector<8x128xbf16>
    %cst_18 = arith.constant dense<0.000000e+00> : vector<8x128xf32>
    %22 = tpu.matmul %21, %2, %cst_18 {dimension_numbers = #tpu.dot_dimension_numbers<[1], [0], [0], [1], [0, 0, 1, 1], [], []>} : vector<8x128xbf16>, vector<128x128xbf16>, vector<8x128xf32> -> vector<8x128xf32>
    %23 = arith.truncf %22 : vector<8x128xf32> to vector<8x128xbf16>
    %24 = vector.broadcast %7 : vector<1x128xbf16> to vector<8x128xbf16>
    %25 = arith.addf %23, %24 : vector<8x128xbf16>
    %cst_19 = arith.constant 0.000000e+00 : bf16
    %26 = vector.broadcast %cst_19 : bf16 to vector<8x128xbf16>
    %27 = arith.maximumf %25, %26 : vector<8x128xbf16>
    %28 = vector.broadcast %9 : vector<1x128xbf16> to vector<8x128xbf16>
    %29 = arith.mulf %27, %28 : vector<8x128xbf16>
    %30 = arith.extf %29 : vector<8x128xbf16> to vector<8x128xf32>
    %cst_20 = arith.constant dense<0.000000e+00> : vector<8xf32>
    %31 = vector.multi_reduction <add>, %30, %cst_20 [1] : vector<8x128xf32> to vector<8xf32>
    %32 = vector.broadcast %3 : f32 to vector<8xf32>
    %33 = arith.addf %31, %32 : vector<8xf32>
    %c0_21 = arith.constant 0 : index
    %c0_22 = arith.constant 0 : index
    %34 = vector.load %arg10[%c0_21, %c0_22] : memref<1x8xf32, #tpu.memory_space<vmem>>, vector<1x8xf32>
    %35 = vector.shape_cast %34 : vector<1x8xf32> to vector<8xf32>
    %36 = vector.shape_cast %33 : vector<8xf32> to vector<1x8xf32>
    tpu.vector_store %arg10[%c0_21, %c0_22], %36 {strides = array<i32>} : memref<1x8xf32, #tpu.memory_space<vmem>>, vector<1x8xf32>,
    return
  }
  func.func @transform_0(%arg0: i32) -> (i32, i32) {
    %c0_i32 = arith.constant 0 : i32
    %c0_i32_0 = arith.constant 0 : i32
    return %arg0, %c0_i32 : i32, i32
  }
  func.func @transform_1(%arg0: i32) -> (i32, i32) {
    %c0_i32 = arith.constant 0 : i32
    %c0_i32_0 = arith.constant 0 : i32
    return %arg0, %c0_i32 : i32, i32
  }
  func.func @transform_2(%arg0: i32) -> (i32, i32) {
    %c0_i32 = arith.constant 0 : i32
    %c0_i32_0 = arith.constant 0 : i32
    %c0_i32_1 = arith.constant 0 : i32
    return %c0_i32, %c0_i32_0 : i32, i32
  }
  func.func @transform_3(%arg0: i32) -> (i32, i32) {
    %c0_i32 = arith.constant 0 : i32
    %c0_i32_0 = arith.constant 0 : i32
    %c0_i32_1 = arith.constant 0 : i32
    return %c0_i32, %c0_i32_0 : i32, i32
  }
  func.func @transform_4(%arg0: i32) -> (i32, i32) {
    %c0_i32 = arith.constant 0 : i32
    %c0_i32_0 = arith.constant 0 : i32
    %c0_i32_1 = arith.constant 0 : i32
    return %c0_i32, %c0_i32_0 : i32, i32
  }
  func.func @transform_5(%arg0: i32) -> (i32, i32) {
    %c0_i32 = arith.constant 0 : i32
    %c0_i32_0 = arith.constant 0 : i32
    %c0_i32_1 = arith.constant 0 : i32
    return %c0_i32, %c0_i32_0 : i32, i32
  }
  func.func @transform_6(%arg0: i32) -> (i32, i32) {
    %c0_i32 = arith.constant 0 : i32
    %c0_i32_0 = arith.constant 0 : i32
    %c0_i32_1 = arith.constant 0 : i32
    return %c0_i32, %c0_i32_0 : i32, i32
  }
  func.func @transform_7(%arg0: i32) -> (i32, i32) {
    %c0_i32 = arith.constant 0 : i32
    %c0_i32_0 = arith.constant 0 : i32
    %c0_i32_1 = arith.constant 0 : i32
    return %c0_i32, %c0_i32_0 : i32, i32
  }
  func.func @transform_8(%arg0: i32) -> i32 {
    %c0_i32 = arith.constant 0 : i32
    %c0_i32_0 = arith.constant 0 : i32
    return %c0_i32 : i32
  }
  func.func @transform_9(%arg0: i32) -> (i32, i32) {
    %c0_i32 = arith.constant 0 : i32
    %c0_i32_0 = arith.constant 0 : i32
    return %c0_i32, %arg0 : i32, i32
  }
}

</mosaic_0001>

<llo_original>
// kernel: qvalue_forward.1
$region0: #{qvalue_forward.1}
  #allocation0 [shape = 'u32[]', space=smem, size = 0x4, offset = 0x4, fixed_abs, tag = 'smem constant byte address 0x4 - core index']
  #allocation1 [shape = 'u32[144,128]{1,0:T(1,128)}', space=vmem, size = 0x12000, scoped, tag = 'internal scratch']
  #allocation2 [shape = 'f32[1]{0:T(128)S(6)}', space=smem, size = 0x200, scoped, tag = 'scoped memory for qvalue_forward.1']
  %s0 = inlined_call_operand.vmem [shape: f32[8,4], index: 0, kind: input, shape index: {}]
  %s1 = inlined_call_operand.vmem [shape: f32[8,2], index: 1, kind: input, shape index: {}]
  %s2 = inlined_call_operand.vmem [shape: bf16[4,128], index: 2, kind: input, shape index: {}]
  %s3 = inlined_call_operand.vmem [shape: bf16[2,128], index: 3, kind: input, shape index: {}]
  %s4 = inlined_call_operand.vmem [shape: f32[1,128], index: 4, kind: input, shape index: {}]
  %s5 = inlined_call_operand.hbm [shape: bf16[128,128], index: 5, kind: input, shape index: {}]
  %s6 = inlined_call_operand.vmem [shape: f32[1,128], index: 6, kind: input, shape index: {}]
  %s7 = inlined_call_operand.vmem [shape: f32[1,128], index: 7, kind: input, shape index: {}]
  %s8 = inlined_call_operand.<no memory space> [shape: f32[1], index: 8, kind: input, shape index: {}]
  %s9 = inlined_call_operand.hbm [shape: f32[1,8], index: 9, kind: output, shape index: {}]
  %s10 = sld [smem:[#allocation0]]
  $region50: #{qvalue_forward.1} parent=0
    _
  %s12 = ssub.s32 1, %s10
  %s13 = scalar_select 0, %s12, %s10
  %14 = sst [smem:[#allocation2]] %s8
  $region1: #{qvalue_forward.1} parent=0
    #allocation3 [shape = 'u8[32768]{0}', space=vmem, size = 0x8000, scoped, tag = 'input window, operand 5, single buffered']
    #allocation4 [shape = 's32[1]{0}', space=sflag, size = 0x4, scoped, tag = 'scoped memory for qvalue_forward.1']
    #allocation5 [shape = 's32[1]{0}', space=sflag, size = 0x4, scoped, tag = 'scoped memory for qvalue_forward.1']
    #allocation6 [shape = 'u8[512]{0}', space=vmem, size = 0x400, scoped, tag = 'output window, operand 0, single buffered']
    %15 = vsyncpa [#allocation4], 0
    %16 = vsyncpa [#allocation5], 0
    // Predicated region
    $region2: #{qvalue_forward.1} parent=1 // pred_check
      _
    $region3: #{qvalue_forward.1} parent=1 // pred_check_branch
      %18 = sbr.rel (0) target = $region5
    $region4: #{qvalue_forward.1} parent=1 // pred_region
      _
    $region5: #{qvalue_forward.1} parent=1 // pred_fallthru
      _
    // Predicated region
    $region6: #{qvalue_forward.1} parent=1 // pred_check
      _
    $region7: #{qvalue_forward.1} parent=1 // pred_check_branch
      %20 = sbr.rel (0) target = $region9
    $region8: #{qvalue_forward.1} parent=1 // pred_region
      _
    $region9: #{qvalue_forward.1} parent=1 // pred_fallthru
      _
    // Predicated region
    $region10: #{qvalue_forward.1} parent=1 // pred_check
      _
    $region11: #{qvalue_forward.1} parent=1 // pred_check_branch
      %22 = sbr.rel (0) target = $region13
    $region12: #{qvalue_forward.1} parent=1 // pred_region
      _
    $region13: #{qvalue_forward.1} parent=1 // pred_fallthru
      _
    // Predicated region
    $region14: #{qvalue_forward.1} parent=1 // pred_check
      _
    $region15: #{qvalue_forward.1} parent=1 // pred_check_branch
      %24 = sbr.rel (0) target = $region17
    $region16: #{qvalue_forward.1} parent=1 // pred_region
      _
    $region17: #{qvalue_forward.1} parent=1 // pred_fallthru
      _
    // Predicated region
    $region18: #{qvalue_forward.1} parent=1 // pred_check
      _
    $region19: #{qvalue_forward.1} parent=1 // pred_check_branch
      %26 = sbr.rel (0) target = $region21
    $region20: #{qvalue_forward.1} parent=1 // pred_region
      _
    $region21: #{qvalue_forward.1} parent=1 // pred_fallthru
      _
    // Predicated region
    $region22: #{qvalue_forward.1} parent=1 // pred_check
      _
    $region23: #{qvalue_forward.1} parent=1 // pred_check_branch
      %28 = sbr.rel (0) target = $region25
    $region24: #{qvalue_forward.1} parent=1 // pred_region
      %s30 = ssub.s32 1024, 1024
      %31 = vsyncadd [#allocation4], %s30
      %s32 = sshll.u32 [#allocation3], 4
      %s33 = int_to_ptr.vmem [resolvable:$true] %s32
      %38 = dma.hbm_to_vmem [thread:$0]  %s5, 1024, %s33, [#allocation4], 64, 64, 4
    $region25: #{qvalue_forward.1} parent=1 // pred_fallthru
      _
    // Predicated region
    $region26: #{qvalue_forward.1} parent=1 // pred_check
      _
    $region27: #{qvalue_forward.1} parent=1 // pred_check_branch
      %40 = sbr.rel (0) target = $region29
    $region28: #{qvalue_forward.1} parent=1 // pred_region
      _
    $region29: #{qvalue_forward.1} parent=1 // pred_fallthru
      _
    // Predicated region
    $region30: #{qvalue_forward.1} parent=1 // pred_check
      _
    $region31: #{qvalue_forward.1} parent=1 // pred_check_branch
      %42 = sbr.rel (0) target = $region33
    $region32: #{qvalue_forward.1} parent=1 // pred_region
      _
    $region33: #{qvalue_forward.1} parent=1 // pred_fallthru
      _
    // Predicated region
    $region34: #{qvalue_forward.1} parent=1 // pred_check
      _
    $region35: #{qvalue_forward.1} parent=1 // pred_check_branch
      %44 = sbr.rel (0) target = $region37
    $region36: #{qvalue_forward.1} parent=1 // pred_region
      _
    $region37: #{qvalue_forward.1} parent=1 // pred_fallthru
      _
    // Predicated region
    $region38: #{qvalue_forward.1} parent=1 // pred_check
      _
    $region39: #{qvalue_forward.1} parent=1 // pred_check_branch
      %46 = sbr.rel (0) target = $region41
    $region40: #{qvalue_forward.1} parent=1 // pred_region
      %47 = dma.done [#allocation4], 1024
    $region41: #{qvalue_forward.1} parent=1 // pred_fallthru
      _
    %v49 = vld [vmem:[%s2] sm:$0x3]
    %v50 = vld [vmem:[%s3] sm:$0x1]
    %v51 = vld [vmem:[#allocation3] sm:$0xf]
    %v52 = vld [vmem:[#allocation3 + $0x4] sm:$0xf]
    %v53 = vld [vmem:[#allocation3 + $0x8] sm:$0xf]
    %v54 = vld [vmem:[#allocation3 + $0xc] sm:$0xf]
    %v55 = vld [vmem:[#allocation3 + $0x10] sm:$0xf]
    %v56 = vld [vmem:[#allocation3 + $0x14] sm:$0xf]
    %v57 = vld [vmem:[#allocation3 + $0x18] sm:$0xf]
    %v58 = vld [vmem:[#allocation3 + $0x1c] sm:$0xf]
    %v59 = vld [vmem:[#allocation3 + $0x20] sm:$0xf]
    %v60 = vld [vmem:[#allocation3 + $0x24] sm:$0xf]
    %v61 = vld [vmem:[#allocation3 + $0x28] sm:$0xf]
    %v62 = vld [vmem:[#allocation3 + $0x2c] sm:$0xf]
    %v63 = vld [vmem:[#allocation3 + $0x30] sm:$0xf]
    %v64 = vld [vmem:[#allocation3 + $0x34] sm:$0xf]
    %v65 = vld [vmem:[#allocation3 + $0x38] sm:$0xf]
    %v66 = vld [vmem:[#allocation3 + $0x3c] sm:$0xf]
    %s67 = sld [smem:[#allocation2]]
    %v68 = vld [vmem:[%s4] sm:$0x1]
    %v69 = vpack.c.bf16 %v68, %v68
    %v70 = vld [vmem:[%s6] sm:$0x1]
    %v71 = vpack.c.bf16 %v70, %v70
    %v72 = vld [vmem:[%s7] sm:$0x1]
    %v73 = vpack.c.bf16 %v72, %v72
    %v74 = vld [vmem:[%s0] sm:$0xff]
    %v75 = vpack.c.bf16 %v74, %v74
    %v76 = vld [vmem:[%s1] sm:$0xff]
    %v77 = vpack.c.bf16 %v76, %v76
    %vm78 = vcmask 15360
    %v80 = vsel %vm78, %v77, 0
    %vm82 = vcmask 1040384
    %v84 = vsel %vm82, %v50, 0
    %86 = vmatprep.subr.bf16.mxu0 0
    %87 = vmatpush1.bf16.msra.mxu0 %v84
    %88 = vmatprep.subr.bf16.mxu0 0
    %89 = vmatpush1.bf16.msra.mxu0 0
    %90 = vmatprep.subr.bf16.mxu0 0
    %91 = vmatpush1.bf16.msra.mxu0 0
    %92 = vmatprep.subr.bf16.mxu0 0
    %93 = vmatpush1.bf16.msra.mxu0 0
    %94 = vmatprep.subr.bf16.mxu0 0
    %95 = vmatpush1.bf16.msra.mxu0 0
    %96 = vmatprep.subr.bf16.mxu0 0
    %97 = vmatpush1.bf16.msra.mxu0 0
    %98 = vmatprep.subr.bf16.mxu0 0
    %99 = vmatpush1.bf16.msra.mxu0 0
    %100 = vmatprep.subr.bf16.mxu0 0
    %101 = vmatpush1.bf16.msra.mxu0 0
    %102 = vmatprep.subr.bf16.mxu0 0
    %103 = vmatpush1.bf16.msra.mxu0 0
    %104 = vmatprep.subr.bf16.mxu0 0
    %105 = vmatpush1.bf16.msra.mxu0 0
    %106 = vmatprep.subr.bf16.mxu0 0
    %107 = vmatpush1.bf16.msra.mxu0 0
    %108 = vmatprep.subr.bf16.mxu0 0
    %109 = vmatpush1.bf16.msra.mxu0 0
    %110 = vmatprep.subr.bf16.mxu0 0
    %111 = vmatpush1.bf16.msra.mxu0 0
    %112 = vmatprep.subr.bf16.mxu0 0
    %113 = vmatpush1.bf16.msra.mxu0 0
    %114 = vmatprep.subr.bf16.mxu0 0
    %115 = vmatpush1.bf16.msra.mxu0 0
    %116 = vmatprep.subr.bf16.mxu0 0
    %117 = vmatpush1.bf16.msra.mxu0 0
    %118 = vmatprep.mubr.bf16.mxu0 0
    %119 = vmatmul.mubr.bf16.gmra.mrb[0].mxu0 %v80
    %v120 = vpop.f32.mrb[0].mxu0
    %v121 = vadd.f32 0.0, %v120
    %v122 = vpop.f32.mrb[0].mxu0
    %v123 = vpop.f32.mrb[0].mxu0
    %v124 = vpop.f32.mrb[0].mxu0
    %125 = vdwg.mxu0
    %vm126 = vcmask 31744
    %v128 = vsel %vm126, %v75, 0
    %vm130 = vcmask 1041408
    %v132 = vsel %vm130, %v49, 0
    %134 = vmatprep.subr.bf16.mxu0 0
    %135 = vmatpush1.bf16.msra.mxu0 %v132
    %136 = vmatprep.subr.bf16.mxu0 0
    %137 = vmatpush1.bf16.msra.mxu0 0
    %138 = vmatprep.subr.bf16.mxu0 0
    %139 = vmatpush1.bf16.msra.mxu0 0
    %140 = vmatprep.subr.bf16.mxu0 0
    %141 = vmatpush1.bf16.msra.mxu0 0
    %142 = vmatprep.subr.bf16.mxu0 0
    %143 = vmatpush1.bf16.msra.mxu0 0
    %144 = vmatprep.subr.bf16.mxu0 0
    %145 = vmatpush1.bf16.msra.mxu0 0
    %146 = vmatprep.subr.bf16.mxu0 0
    %147 = vmatpush1.bf16.msra.mxu0 0
    %148 = vmatprep.subr.bf16.mxu0 0
    %149 = vmatpush1.bf16.msra.mxu0 0
    %150 = vmatprep.subr.bf16.mxu0 0
    %151 = vmatpush1.bf16.msra.mxu0 0
    %152 = vmatprep.subr.bf16.mxu0 0
    %153 = vmatpush1.bf16.msra.mxu0 0
    %154 = vmatprep.subr.bf16.mxu0 0
    %155 = vmatpush1.bf16.msra.mxu0 0
    %156 = vmatprep.subr.bf16.mxu0 0
    %157 = vmatpush1.bf16.msra.mxu0 0
    %158 = vmatprep.subr.bf16.mxu0 0
    %159 = vmatpush1.bf16.msra.mxu0 0
    %160 = vmatprep.subr.bf16.mxu0 0
    %161 = vmatpush1.bf16.msra.mxu0 0
    %162 = vmatprep.subr.bf16.mxu0 0
    %163 = vmatpush1.bf16.msra.mxu0 0
    %164 = vmatprep.subr.bf16.mxu0 0
    %165 = vmatpush1.bf16.msra.mxu0 0
    %166 = vmatprep.mubr.bf16.mxu0 0
    %167 = vmatmul.mubr.bf16.gmra.mrb[0].mxu0 %v128
    %v168 = vpop.f32.mrb[0].mxu0
    %v169 = vadd.f32 %v121, %v168
    %v170 = vpop.f32.mrb[0].mxu0
    %v171 = vpop.f32.mrb[0].mxu0
    %v172 = vpop.f32.mrb[0].mxu0
    %173 = vdwg.mxu0
    %v174 = vpack.c.bf16 %v169, %v169
    %v176 = vpack.i.b16 %v69, %v69
    %v178 = vlaneseq
    %v179 = vshrl.u32 %v178, 7
    %v180 = vsub.s32 0, %v179
    %v181 = vrot.slane %v176, %v180
    %v182 = vadd.bf16 %v174, %v181
    %v183 = vmax.bf16 %v182, 0
    %v200 = vunpack.c.l.b16 %v51
    %v201 = vunpack.c.l.b16 %v52
    %v202 = vunpack.c.l.b16 %v53
    %v203 = vunpack.c.l.b16 %v54
    %v204 = vunpack.c.l.b16 %v55
    %v205 = vunpack.c.l.b16 %v56
    %v206 = vunpack.c.l.b16 %v57
    %v207 = vunpack.c.l.b16 %v58
    %v208 = vunpack.c.l.b16 %v59
    %v209 = vunpack.c.l.b16 %v60
    %v210 = vunpack.c.l.b16 %v61
    %v211 = vunpack.c.l.b16 %v62
    %v212 = vunpack.c.l.b16 %v63
    %v213 = vunpack.c.l.b16 %v64
    %v214 = vunpack.c.l.b16 %v65
    %v215 = vunpack.c.l.b16 %v66
    %v216 = vpack.c.b16 %v201, %v200
    %v217 = vpack.c.b16 %v203, %v202
    %v218 = vpack.c.b16 %v205, %v204
    %v219 = vpack.c.b16 %v207, %v206
    %v220 = vpack.c.b16 %v209, %v208
    %v221 = vpack.c.b16 %v211, %v210
    %v222 = vpack.c.b16 %v213, %v212
    %v223 = vpack.c.b16 %v215, %v214
    %232 = vmatprep.subr.bf16.mxu0 0
    %233 = vmatpush1.bf16.msra.mxu0 %v216
    %234 = vmatprep.subr.bf16.mxu0 0
    %235 = vmatpush1.bf16.msra.mxu0 %v217
    %236 = vmatprep.subr.bf16.mxu0 0
    %237 = vmatpush1.bf16.msra.mxu0 %v218
    %238 = vmatprep.subr.bf16.mxu0 0
    %239 = vmatpush1.bf16.msra.mxu0 %v219
    %240 = vmatprep.subr.bf16.mxu0 0
    %241 = vmatpush1.bf16.msra.mxu0 %v220
    %242 = vmatprep.subr.bf16.mxu0 0
    %243 = vmatpush1.bf16.msra.mxu0 %v221
    %244 = vmatprep.subr.bf16.mxu0 0
    %245 = vmatpush1.bf16.msra.mxu0 %v222
    %246 = vmatprep.subr.bf16.mxu0 0
    %247 = vmatpush1.bf16.msra.mxu0 %v223
    %248 = vmatprep.subr.bf16.mxu0 0
    %249 = vmatpush1.bf16.msra.mxu0 0
    %250 = vmatprep.subr.bf16.mxu0 0
    %251 = vmatpush1.bf16.msra.mxu0 0
    %252 = vmatprep.subr.bf16.mxu0 0
    %253 = vmatpush1.bf16.msra.mxu0 0
    %254 = vmatprep.subr.bf16.mxu0 0
    %255 = vmatpush1.bf16.msra.mxu0 0
    %256 = vmatprep.subr.bf16.mxu0 0
    %257 = vmatpush1.bf16.msra.mxu0 0
    %258 = vmatprep.subr.bf16.mxu0 0
    %259 = vmatpush1.bf16.msra.mxu0 0
    %260 = vmatprep.subr.bf16.mxu0 0
    %261 = vmatpush1.bf16.msra.mxu0 0
    %262 = vmatprep.subr.bf16.mxu0 0
    %263 = vmatpush1.bf16.msra.mxu0 0
    %264 = vmatprep.mubr.bf16.mxu0 0
    %265 = vmatmul.mubr.bf16.gmra.mrb[0].mxu0 %v183
    %v266 = vpop.f32.mrb[0].mxu0
    %v267 = vadd.f32 0.0, %v266
    %v268 = vpop.f32.mrb[0].mxu0
    %v269 = vpop.f32.mrb[0].mxu0
    %v270 = vpop.f32.mrb[0].mxu0
    %271 = vdwg.mxu0
    %v272 = vpack.c.bf16 %v267, %v267
    %v274 = vpack.i.b16 %v71, %v71
    %v276 = vlaneseq
    %v277 = vshrl.u32 %v276, 7
    %v278 = vsub.s32 0, %v277
    %v279 = vrot.slane %v274, %v278
    %v280 = vadd.bf16 %v272, %v279
    %v281 = vmax.bf16 %v280, 0
    %v283 = vpack.i.b16 %v73, %v73
    %v285 = vlaneseq
    %v286 = vshrl.u32 %v285, 7
    %v287 = vsub.s32 0, %v286
    %v288 = vrot.slane %v283, %v287
    %v289 = vmul.bf16 %v281, %v288
    %v290 = vunpack.c.l.bf16 %v289
    %291 = vadd.xlane.f32.xlu0 %v290
    %v292 = vpop.xlane.xlu0 %291
    %v293 = vstv %s67
    %v294 = vadd.f32 %v292, %v293
    %v296 = vlaneseq
    %v297 = vand.u32 %v296, 127
    %v298 = vlaneseq
    %v299 = vshrl.u32 %v298, 7
    %v300 = vsub.s32 %v297, %v299
    %v301 = vrot.slane %v294, %v300
    %vm303 = vcmask 57344
    %304 = vst.msk [vmem:[#allocation6] sm:$0x1] %vm303, %v301
    // Predicated region
    $region42: #{qvalue_forward.1} parent=1 // pred_check
      _
    $region43: #{qvalue_forward.1} parent=1 // pred_check_branch
      %306 = sbr.rel (0) target = $region45
    $region44: #{qvalue_forward.1} parent=1 // pred_region
      %s308 = ssub.s32 16, 16
      %309 = vsyncadd [#allocation5], %s308
      %s311 = sshll.u32 [#allocation6], 4
      %s312 = int_to_ptr.vmem [resolvable:$true] %s311
      %314 = dma.vmem_to_hbm [thread:$0]  %s312, 16, %s9, [#allocation5]
    $region45: #{qvalue_forward.1} parent=1 // pred_fallthru
      _
    // Predicated region
    $region46: #{qvalue_forward.1} parent=1 // pred_check
      _
    $region47: #{qvalue_forward.1} parent=1 // pred_check_branch
      %316 = sbr.rel (0) target = $region49
    $region48: #{qvalue_forward.1} parent=1 // pred_region
      %317 = dma.done [#allocation5], 16
    $region49: #{qvalue_forward.1} parent=1 // pred_fallthru
      _
    %318 = vsyncpa [#allocation4], 1
    %319 = vsyncpa [#allocation5], 1

</llo_original>
